<compile_context>
chip_gen: v7x
topology: tpu7x:2x2x1
jax: 0.10.0
libtpu: 0.0.40
codegen_flags: <defaults>
</compile_context>

<pallas_src>
import functools

import jax
import jax.numpy as jnp
from jax import lax
from jax.experimental import pallas as pl
from jax.experimental.pallas import tpu as pltpu


def _maxpool2d_kernel(x_ref, o_ref, t_ref, p_ref, *, H, W, OH, OW, K, S, CC, NCHUNK):
    # x_ref : (NC, H*W)            NC on sublanes, flattened H*W on lanes
    # o_ref : (NC, OH*OW)
    # t_ref : (NCHUNK, H*W, CC)    scratch: channels moved onto the lane axis
    # p_ref : (NCHUNK, OH*OW, CC)  scratch: pooled result, pre output-transpose

    # ---- Step 1: bring channels onto lanes, one chunk of CC channels at a time.
    # t_ref[g, h*W + w, j] = x[g*CC + j, h*W + w]
    def put_chunk(g, carry):
        c0 = pl.multiple_of(g * CC, CC)
        t_ref[g, :, :] = x_ref[pl.ds(c0, CC), :].T          # (H*W, CC) vxpose
        return carry

    lax.fori_loop(0, NCHUNK, put_chunk, 0)

    # ---- Step 2: windowed max, fully lane-dense (C on lanes).
    # For each output row oh: 9 sublane-strided reads (stride S along the
    # flattened H*W axis selects the OW window starts) reduced with jnp.maximum.
    for oh in range(OH):                                    # static, small
        acc = None
        for dh in range(K):
            for dw in range(K):
                base = (S * oh + dh) * W + dw               # static scalar
                v = t_ref[:, pl.ds(base, OW, stride=S), :]  # (NCHUNK, OW, CC)
                acc = v if acc is None else jnp.maximum(acc, v)
        p_ref[:, pl.ds(oh * OW, OW), :] = acc

    # ---- Step 3: back to channel-major (NCHW) and store.
    # o_ref[g*CC + j, p] = p_ref[g, p, j]
    def get_chunk(g, carry):
        c0 = pl.multiple_of(g * CC, CC)
        o_ref[pl.ds(c0, CC), :] = p_ref[g, :, :].T          # (CC, OH*OW) vxpose
        return carry

    lax.fori_loop(0, NCHUNK, get_chunk, 0)


def _channel_chunk(nc):
    # Largest convenient divisor of N*C (keeps transpose operands <= ~40 vregs).
    for cand in (64, 32, 16, 8):
        if nc % cand == 0:
            return cand
    return nc


@functools.partial(jax.jit, static_argnames=("kernel_size", "stride"))
def maxpool2d_nchw(x, kernel_size=3, stride=2):
    """MaxPool2d with padding=0, dilation=1, ceil_mode=False on NCHW input."""
    N, C, H, W = x.shape
    K, S = int(kernel_size), int(stride)
    OH = (H - K) // S + 1
    OW = (W - K) // S + 1
    NC = N * C
    CC = _channel_chunk(NC)
    NCHUNK = NC // CC

    x2 = x.reshape(NC, H * W)  # contiguous collapse -> free (no data movement)

    kernel = functools.partial(
        _maxpool2d_kernel,
        H=H, W=W, OH=OH, OW=OW, K=K, S=S, CC=CC, NCHUNK=NCHUNK,
    )

    out2 = pl.pallas_call(
        kernel,
        out_shape=jax.ShapeDtypeStruct((NC, OH * OW), x.dtype),
        grid=(1,),
        in_specs=[pl.BlockSpec((NC, H * W), lambda i: (0, 0))],
        out_specs=pl.BlockSpec((NC, OH * OW), lambda i: (0, 0)),
        scratch_shapes=[
            pltpu.VMEM((NCHUNK, H * W, CC), x.dtype),
            pltpu.VMEM((NCHUNK, OH * OW, CC), x.dtype),
        ],
        compiler_params=pltpu.CompilerParams(
            dimension_semantics=("arbitrary",),
        ),
    )(x2)

    return out2.reshape(N, C, OH, OW)  # contiguous collapse -> free


class M:
    """JAX/Pallas equivalent of the PyTorch module M (a single MaxPool2d)."""

    def __init__(self):
        self.kernel_size = 3
        self.stride = 2

    def __call__(self, x12):
        return maxpool2d_nchw(x12, kernel_size=self.kernel_size, stride=self.stride)


if __name__ == "__main__":
    key = jax.random.PRNGKey(0)
    # Same shape as the reference module's example input: [1, 256, 13, 13]
    x12 = jax.random.normal(key, (1, 256, 13, 13), dtype=jnp.float32)

    m = M()
    x13 = m(x12)
    x13 = jax.block_until_ready(x13)

    assert x13.shape == (1, 256, 6, 6), x13.shape

    # Pure-JAX reference for correctness.
    ref = jax.lax.reduce_window(
        x12, -jnp.inf, jax.lax.max,
        window_dimensions=(1, 1, 3, 3),
        window_strides=(1, 1, 2, 2),
        padding="VALID",
    )
    assert jnp.allclose(x13, ref), "mismatch vs lax.reduce_window reference"

    print("KERNEL_OK")
</pallas_src>

<mosaic_0001>
module attributes {stable_mosaic.version = 11 : i64} {
  func.func @_maxpool2d_kernel(%arg0: i32, %arg1: memref<256x169xf32, #tpu.memory_space<vmem>>, %arg2: memref<256x36xf32, #tpu.memory_space<vmem>>, %arg3: memref<4x169x64xf32, #tpu.memory_space<vmem>>, %arg4: memref<4x36x64xf32, #tpu.memory_space<vmem>>) attributes {dimension_semantics = [#tpu.dimension_semantics<arbitrary>], iteration_bounds = array<i64: 1>, scalar_prefetch = 0 : i64, scratch_operands = 2 : i64, tpu.core_type = #tpu.core_type<tc>, window_params = [{pipeline_mode = #tpu.pipeline_mode<synchronous>, transform_indices = @transform_0, window_bounds = array<i64: 256, 169>}, {pipeline_mode = #tpu.pipeline_mode<synchronous>, transform_indices = @transform_1, window_bounds = array<i64: 256, 36>}]} {
    %c0_i32 = arith.constant 0 : i32
    %c4_i32 = arith.constant 4 : i32
    %0 = arith.addi %c0_i32, %c4_i32 : i32
    %c1_i32 = arith.constant 1 : i32
    scf.for %arg5 = %c0_i32 to %0 step %c1_i32  : i32 {
      %c64_i32 = arith.constant 64 : i32
      %110 = arith.muli %arg5, %c64_i32 : i32
      %111 = tpu.assume_multiple %110, 64 : i32
      %112 = arith.index_cast %111 : i32 to index
      %c0_141 = arith.constant 0 : index
      %113 = vector.load %arg1[%112, %c0_141] : memref<256x169xf32, #tpu.memory_space<vmem>>, vector<64x169xf32>
      %114 = tpu.transpose %113, [1, 0] : vector<64x169xf32> -> vector<169x64xf32>
      %115 = arith.index_cast %arg5 : i32 to index
      %c0_142 = arith.constant 0 : index
      %c0_143 = arith.constant 0 : index
      %116 = vector.load %arg3[%115, %c0_142, %c0_143] : memref<4x169x64xf32, #tpu.memory_space<vmem>>, vector<1x169x64xf32>
      %117 = vector.shape_cast %116 : vector<1x169x64xf32> to vector<169x64xf32>
      %118 = vector.shape_cast %114 : vector<169x64xf32> to vector<1x169x64xf32>
      tpu.vector_store %arg3[%115, %c0_142, %c0_143], %118 {strides = array<i32>} : memref<4x169x64xf32, #tpu.memory_space<vmem>>, vector<1x169x64xf32>,
    }
    %c4_i32_0 = arith.constant 4 : i32
    %c0 = arith.constant 0 : index
    %c0_1 = arith.constant 0 : index
    %c0_2 = arith.constant 0 : index
    %1 = tpu.strided_load %arg3[%c0, %c0_1, %c0_2] {strides = array<i32: 1, 2, 1>} : memref<4x169x64xf32, #tpu.memory_space<vmem>>, vector<4x6x64xf32>
    %c0_3 = arith.constant 0 : index
    %c1 = arith.constant 1 : index
    %c0_4 = arith.constant 0 : index
    %2 = tpu.strided_load %arg3[%c0_3, %c1, %c0_4] {strides = array<i32: 1, 2, 1>} : memref<4x169x64xf32, #tpu.memory_space<vmem>>, vector<4x6x64xf32>
    %3 = arith.maximumf %1, %2 : vector<4x6x64xf32>
    %c0_5 = arith.constant 0 : index
    %c2 = arith.constant 2 : index
    %c0_6 = arith.constant 0 : index
    %4 = tpu.strided_load %arg3[%c0_5, %c2, %c0_6] {strides = array<i32: 1, 2, 1>} : memref<4x169x64xf32, #tpu.memory_space<vmem>>, vector<4x6x64xf32>
    %5 = arith.maximumf %3, %4 : vector<4x6x64xf32>
    %c0_7 = arith.constant 0 : index
    %c13 = arith.constant 13 : index
    %c0_8 = arith.constant 0 : index
    %6 = tpu.strided_load %arg3[%c0_7, %c13, %c0_8] {strides = array<i32: 1, 2, 1>} : memref<4x169x64xf32, #tpu.memory_space<vmem>>, vector<4x6x64xf32>
    %7 = arith.maximumf %5, %6 : vector<4x6x64xf32>
    %c0_9 = arith.constant 0 : index
    %c14 = arith.constant 14 : index
    %c0_10 = arith.constant 0 : index
    %8 = tpu.strided_load %arg3[%c0_9, %c14, %c0_10] {strides = array<i32: 1, 2, 1>} : memref<4x169x64xf32, #tpu.memory_space<vmem>>, vector<4x6x64xf32>
    %9 = arith.maximumf %7, %8 : vector<4x6x64xf32>
    %c0_11 = arith.constant 0 : index
    %c15 = arith.constant 15 : index
    %c0_12 = arith.constant 0 : index
    %10 = tpu.strided_load %arg3[%c0_11, %c15, %c0_12] {strides = array<i32: 1, 2, 1>} : memref<4x169x64xf32, #tpu.memory_space<vmem>>, vector<4x6x64xf32>
    %11 = arith.maximumf %9, %10 : vector<4x6x64xf32>
    %c0_13 = arith.constant 0 : index
    %c26 = arith.constant 26 : index
    %c0_14 = arith.constant 0 : index
    %12 = tpu.strided_load %arg3[%c0_13, %c26, %c0_14] {strides = array<i32: 1, 2, 1>} : memref<4x169x64xf32, #tpu.memory_space<vmem>>, vector<4x6x64xf32>
    %13 = arith.maximumf %11, %12 : vector<4x6x64xf32>
    %c0_15 = arith.constant 0 : index
    %c27 = arith.constant 27 : index
    %c0_16 = arith.constant 0 : index
    %14 = tpu.strided_load %arg3[%c0_15, %c27, %c0_16] {strides = array<i32: 1, 2, 1>} : memref<4x169x64xf32, #tpu.memory_space<vmem>>, vector<4x6x64xf32>
    %15 = arith.maximumf %13, %14 : vector<4x6x64xf32>
    %c0_17 = arith.constant 0 : index
    %c28 = arith.constant 28 : index
    %c0_18 = arith.constant 0 : index
    %16 = tpu.strided_load %arg3[%c0_17, %c28, %c0_18] {strides = array<i32: 1, 2, 1>} : memref<4x169x64xf32, #tpu.memory_space<vmem>>, vector<4x6x64xf32>
    %17 = arith.maximumf %15, %16 : vector<4x6x64xf32>
    %c0_19 = arith.constant 0 : index
    %c0_20 = arith.constant 0 : index
    %c0_21 = arith.constant 0 : index
    %18 = vector.load %arg4[%c0_19, %c0_20, %c0_21] : memref<4x36x64xf32, #tpu.memory_space<vmem>>, vector<4x6x64xf32>
    tpu.vector_store %arg4[%c0_19, %c0_20, %c0_21], %17 {strides = array<i32>} : memref<4x36x64xf32, #tpu.memory_space<vmem>>, vector<4x6x64xf32>,
    %c0_22 = arith.constant 0 : index
    %c26_23 = arith.constant 26 : index
    %c0_24 = arith.constant 0 : index
    %19 = tpu.strided_load %arg3[%c0_22, %c26_23, %c0_24] {strides = array<i32: 1, 2, 1>} : memref<4x169x64xf32, #tpu.memory_space<vmem>>, vector<4x6x64xf32>
    %c0_25 = arith.constant 0 : index
    %c27_26 = arith.constant 27 : index
    %c0_27 = arith.constant 0 : index
    %20 = tpu.strided_load %arg3[%c0_25, %c27_26, %c0_27] {strides = array<i32: 1, 2, 1>} : memref<4x169x64xf32, #tpu.memory_space<vmem>>, vector<4x6x64xf32>
    %21 = arith.maximumf %19, %20 : vector<4x6x64xf32>
    %c0_28 = arith.constant 0 : index
    %c28_29 = arith.constant 28 : index
    %c0_30 = arith.constant 0 : index
    %22 = tpu.strided_load %arg3[%c0_28, %c28_29, %c0_30] {strides = array<i32: 1, 2, 1>} : memref<4x169x64xf32, #tpu.memory_space<vmem>>, vector<4x6x64xf32>
    %23 = arith.maximumf %21, %22 : vector<4x6x64xf32>
    %c0_31 = arith.constant 0 : index
    %c39 = arith.constant 39 : index
    %c0_32 = arith.constant 0 : index
    %24 = tpu.strided_load %arg3[%c0_31, %c39, %c0_32] {strides = array<i32: 1, 2, 1>} : memref<4x169x64xf32, #tpu.memory_space<vmem>>, vector<4x6x64xf32>
    %25 = arith.maximumf %23, %24 : vector<4x6x64xf32>
    %c0_33 = arith.constant 0 : index
    %c40 = arith.constant 40 : index
    %c0_34 = arith.constant 0 : index
    %26 = tpu.strided_load %arg3[%c0_33, %c40, %c0_34] {strides = array<i32: 1, 2, 1>} : memref<4x169x64xf32, #tpu.memory_space<vmem>>, vector<4x6x64xf32>
    %27 = arith.maximumf %25, %26 : vector<4x6x64xf32>
    %c0_35 = arith.constant 0 : index
    %c41 = arith.constant 41 : index
    %c0_36 = arith.constant 0 : index
    %28 = tpu.strided_load %arg3[%c0_35, %c41, %c0_36] {strides = array<i32: 1, 2, 1>} : memref<4x169x64xf32, #tpu.memory_space<vmem>>, vector<4x6x64xf32>
    %29 = arith.maximumf %27, %28 : vector<4x6x64xf32>
    %c0_37 = arith.constant 0 : index
    %c52 = arith.constant 52 : index
    %c0_38 = arith.constant 0 : index
    %30 = tpu.strided_load %arg3[%c0_37, %c52, %c0_38] {strides = array<i32: 1, 2, 1>} : memref<4x169x64xf32, #tpu.memory_space<vmem>>, vector<4x6x64xf32>
    %31 = arith.maximumf %29, %30 : vector<4x6x64xf32>
    %c0_39 = arith.constant 0 : index
    %c53 = arith.constant 53 : index
    %c0_40 = arith.constant 0 : index
    %32 = tpu.strided_load %arg3[%c0_39, %c53, %c0_40] {strides = array<i32: 1, 2, 1>} : memref<4x169x64xf32, #tpu.memory_space<vmem>>, vector<4x6x64xf32>
    %33 = arith.maximumf %31, %32 : vector<4x6x64xf32>
    %c0_41 = arith.constant 0 : index
    %c54 = arith.constant 54 : index
    %c0_42 = arith.constant 0 : index
    %34 = tpu.strided_load %arg3[%c0_41, %c54, %c0_42] {strides = array<i32: 1, 2, 1>} : memref<4x169x64xf32, #tpu.memory_space<vmem>>, vector<4x6x64xf32>
    %35 = arith.maximumf %33, %34 : vector<4x6x64xf32>
    %c0_43 = arith.constant 0 : index
    %c6 = arith.constant 6 : index
    %c0_44 = arith.constant 0 : index
    %36 = vector.load %arg4[%c0_43, %c6, %c0_44] : memref<4x36x64xf32, #tpu.memory_space<vmem>>, vector<4x6x64xf32>
    tpu.vector_store %arg4[%c0_43, %c6, %c0_44], %35 {strides = array<i32>} : memref<4x36x64xf32, #tpu.memory_space<vmem>>, vector<4x6x64xf32>,
    %c0_45 = arith.constant 0 : index
    %c52_46 = arith.constant 52 : index
    %c0_47 = arith.constant 0 : index
    %37 = tpu.strided_load %arg3[%c0_45, %c52_46, %c0_47] {strides = array<i32: 1, 2, 1>} : memref<4x169x64xf32, #tpu.memory_space<vmem>>, vector<4x6x64xf32>
    %c0_48 = arith.constant 0 : index
    %c53_49 = arith.constant 53 : index
    %c0_50 = arith.constant 0 : index
    %38 = tpu.strided_load %arg3[%c0_48, %c53_49, %c0_50] {strides = array<i32: 1, 2, 1>} : memref<4x169x64xf32, #tpu.memory_space<vmem>>, vector<4x6x64xf32>
    %39 = arith.maximumf %37, %38 : vector<4x6x64xf32>
    %c0_51 = arith.constant 0 : index
    %c54_52 = arith.constant 54 : index
    %c0_53 = arith.constant 0 : index
    %40 = tpu.strided_load %arg3[%c0_51, %c54_52, %c0_53] {strides = array<i32: 1, 2, 1>} : memref<4x169x64xf32, #tpu.memory_space<vmem>>, vector<4x6x64xf32>
    %41 = arith.maximumf %39, %40 : vector<4x6x64xf32>
    %c0_54 = arith.constant 0 : index
    %c65 = arith.constant 65 : index
    %c0_55 = arith.constant 0 : index
    %42 = tpu.strided_load %arg3[%c0_54, %c65, %c0_55] {strides = array<i32: 1, 2, 1>} : memref<4x169x64xf32, #tpu.memory_space<vmem>>, vector<4x6x64xf32>
    %43 = arith.maximumf %41, %42 : vector<4x6x64xf32>
    %c0_56 = arith.constant 0 : index
    %c66 = arith.constant 66 : index
    %c0_57 = arith.constant 0 : index
    %44 = tpu.strided_load %arg3[%c0_56, %c66, %c0_57] {strides = array<i32: 1, 2, 1>} : memref<4x169x64xf32, #tpu.memory_space<vmem>>, vector<4x6x64xf32>
    %45 = arith.maximumf %43, %44 : vector<4x6x64xf32>
    %c0_58 = arith.constant 0 : index
    %c67 = arith.constant 67 : index
    %c0_59 = arith.constant 0 : index
    %46 = tpu.strided_load %arg3[%c0_58, %c67, %c0_59] {strides = array<i32: 1, 2, 1>} : memref<4x169x64xf32, #tpu.memory_space<vmem>>, vector<4x6x64xf32>
    %47 = arith.maximumf %45, %46 : vector<4x6x64xf32>
    %c0_60 = arith.constant 0 : index
    %c78 = arith.constant 78 : index
    %c0_61 = arith.constant 0 : index
    %48 = tpu.strided_load %arg3[%c0_60, %c78, %c0_61] {strides = array<i32: 1, 2, 1>} : memref<4x169x64xf32, #tpu.memory_space<vmem>>, vector<4x6x64xf32>
    %49 = arith.maximumf %47, %48 : vector<4x6x64xf32>
    %c0_62 = arith.constant 0 : index
    %c79 = arith.constant 79 : index
    %c0_63 = arith.constant 0 : index
    %50 = tpu.strided_load %arg3[%c0_62, %c79, %c0_63] {strides = array<i32: 1, 2, 1>} : memref<4x169x64xf32, #tpu.memory_space<vmem>>, vector<4x6x64xf32>
    %51 = arith.maximumf %49, %50 : vector<4x6x64xf32>
    %c0_64 = arith.constant 0 : index
    %c80 = arith.constant 80 : index
    %c0_65 = arith.constant 0 : index
    %52 = tpu.strided_load %arg3[%c0_64, %c80, %c0_65] {strides = array<i32: 1, 2, 1>} : memref<4x169x64xf32, #tpu.memory_space<vmem>>, vector<4x6x64xf32>
    %53 = arith.maximumf %51, %52 : vector<4x6x64xf32>
    %c0_66 = arith.constant 0 : index
    %c12 = arith.constant 12 : index
    %c0_67 = arith.constant 0 : index
    %54 = vector.load %arg4[%c0_66, %c12, %c0_67] : memref<4x36x64xf32, #tpu.memory_space<vmem>>, vector<4x6x64xf32>
    tpu.vector_store %arg4[%c0_66, %c12, %c0_67], %53 {strides = array<i32>} : memref<4x36x64xf32, #tpu.memory_space<vmem>>, vector<4x6x64xf32>,
    %c0_68 = arith.constant 0 : index
    %c78_69 = arith.constant 78 : index
    %c0_70 = arith.constant 0 : index
    %55 = tpu.strided_load %arg3[%c0_68, %c78_69, %c0_70] {strides = array<i32: 1, 2, 1>} : memref<4x169x64xf32, #tpu.memory_space<vmem>>, vector<4x6x64xf32>
    %c0_71 = arith.constant 0 : index
    %c79_72 = arith.constant 79 : index
    %c0_73 = arith.constant 0 : index
    %56 = tpu.strided_load %arg3[%c0_71, %c79_72, %c0_73] {strides = array<i32: 1, 2, 1>} : memref<4x169x64xf32, #tpu.memory_space<vmem>>, vector<4x6x64xf32>
    %57 = arith.maximumf %55, %56 : vector<4x6x64xf32>
    %c0_74 = arith.constant 0 : index
    %c80_75 = arith.constant 80 : index
    %c0_76 = arith.constant 0 : index
    %58 = tpu.strided_load %arg3[%c0_74, %c80_75, %c0_76] {strides = array<i32: 1, 2, 1>} : memref<4x169x64xf32, #tpu.memory_space<vmem>>, vector<4x6x64xf32>
    %59 = arith.maximumf %57, %58 : vector<4x6x64xf32>
    %c0_77 = arith.constant 0 : index
    %c91 = arith.constant 91 : index
    %c0_78 = arith.constant 0 : index
    %60 = tpu.strided_load %arg3[%c0_77, %c91, %c0_78] {strides = array<i32: 1, 2, 1>} : memref<4x169x64xf32, #tpu.memory_space<vmem>>, vector<4x6x64xf32>
    %61 = arith.maximumf %59, %60 : vector<4x6x64xf32>
    %c0_79 = arith.constant 0 : index
    %c92 = arith.constant 92 : index
    %c0_80 = arith.constant 0 : index
    %62 = tpu.strided_load %arg3[%c0_79, %c92, %c0_80] {strides = array<i32: 1, 2, 1>} : memref<4x169x64xf32, #tpu.memory_space<vmem>>, vector<4x6x64xf32>
    %63 = arith.maximumf %61, %62 : vector<4x6x64xf32>
    %c0_81 = arith.constant 0 : index
    %c93 = arith.constant 93 : index
    %c0_82 = arith.constant 0 : index
    %64 = tpu.strided_load %arg3[%c0_81, %c93, %c0_82] {strides = array<i32: 1, 2, 1>} : memref<4x169x64xf32, #tpu.memory_space<vmem>>, vector<4x6x64xf32>
    %65 = arith.maximumf %63, %64 : vector<4x6x64xf32>
    %c0_83 = arith.constant 0 : index
    %c104 = arith.constant 104 : index
    %c0_84 = arith.constant 0 : index
    %66 = tpu.strided_load %arg3[%c0_83, %c104, %c0_84] {strides = array<i32: 1, 2, 1>} : memref<4x169x64xf32, #tpu.memory_space<vmem>>, vector<4x6x64xf32>
    %67 = arith.maximumf %65, %66 : vector<4x6x64xf32>
    %c0_85 = arith.constant 0 : index
    %c105 = arith.constant 105 : index
    %c0_86 = arith.constant 0 : index
    %68 = tpu.strided_load %arg3[%c0_85, %c105, %c0_86] {strides = array<i32: 1, 2, 1>} : memref<4x169x64xf32, #tpu.memory_space<vmem>>, vector<4x6x64xf32>
    %69 = arith.maximumf %67, %68 : vector<4x6x64xf32>
    %c0_87 = arith.constant 0 : index
    %c106 = arith.constant 106 : index
    %c0_88 = arith.constant 0 : index
    %70 = tpu.strided_load %arg3[%c0_87, %c106, %c0_88] {strides = array<i32: 1, 2, 1>} : memref<4x169x64xf32, #tpu.memory_space<vmem>>, vector<4x6x64xf32>
    %71 = arith.maximumf %69, %70 : vector<4x6x64xf32>
    %c0_89 = arith.constant 0 : index
    %c18 = arith.constant 18 : index
    %c0_90 = arith.constant 0 : index
    %72 = vector.load %arg4[%c0_89, %c18, %c0_90] : memref<4x36x64xf32, #tpu.memory_space<vmem>>, vector<4x6x64xf32>
    tpu.vector_store %arg4[%c0_89, %c18, %c0_90], %71 {strides = array<i32>} : memref<4x36x64xf32, #tpu.memory_space<vmem>>, vector<4x6x64xf32>,
    %c0_91 = arith.constant 0 : index
    %c104_92 = arith.constant 104 : index
    %c0_93 = arith.constant 0 : index
    %73 = tpu.strided_load %arg3[%c0_91, %c104_92, %c0_93] {strides = array<i32: 1, 2, 1>} : memref<4x169x64xf32, #tpu.memory_space<vmem>>, vector<4x6x64xf32>
    %c0_94 = arith.constant 0 : index
    %c105_95 = arith.constant 105 : index
    %c0_96 = arith.constant 0 : index
    %74 = tpu.strided_load %arg3[%c0_94, %c105_95, %c0_96] {strides = array<i32: 1, 2, 1>} : memref<4x169x64xf32, #tpu.memory_space<vmem>>, vector<4x6x64xf32>
    %75 = arith.maximumf %73, %74 : vector<4x6x64xf32>
    %c0_97 = arith.constant 0 : index
    %c106_98 = arith.constant 106 : index
    %c0_99 = arith.constant 0 : index
    %76 = tpu.strided_load %arg3[%c0_97, %c106_98, %c0_99] {strides = array<i32: 1, 2, 1>} : memref<4x169x64xf32, #tpu.memory_space<vmem>>, vector<4x6x64xf32>
    %77 = arith.maximumf %75, %76 : vector<4x6x64xf32>
    %c0_100 = arith.constant 0 : index
    %c117 = arith.constant 117 : index
    %c0_101 = arith.constant 0 : index
    %78 = tpu.strided_load %arg3[%c0_100, %c117, %c0_101] {strides = array<i32: 1, 2, 1>} : memref<4x169x64xf32, #tpu.memory_space<vmem>>, vector<4x6x64xf32>
    %79 = arith.maximumf %77, %78 : vector<4x6x64xf32>
    %c0_102 = arith.constant 0 : index
    %c118 = arith.constant 118 : index
    %c0_103 = arith.constant 0 : index
    %80 = tpu.strided_load %arg3[%c0_102, %c118, %c0_103] {strides = array<i32: 1, 2, 1>} : memref<4x169x64xf32, #tpu.memory_space<vmem>>, vector<4x6x64xf32>
    %81 = arith.maximumf %79, %80 : vector<4x6x64xf32>
    %c0_104 = arith.constant 0 : index
    %c119 = arith.constant 119 : index
    %c0_105 = arith.constant 0 : index
    %82 = tpu.strided_load %arg3[%c0_104, %c119, %c0_105] {strides = array<i32: 1, 2, 1>} : memref<4x169x64xf32, #tpu.memory_space<vmem>>, vector<4x6x64xf32>
    %83 = arith.maximumf %81, %82 : vector<4x6x64xf32>
    %c0_106 = arith.constant 0 : index
    %c130 = arith.constant 130 : index
    %c0_107 = arith.constant 0 : index
    %84 = tpu.strided_load %arg3[%c0_106, %c130, %c0_107] {strides = array<i32: 1, 2, 1>} : memref<4x169x64xf32, #tpu.memory_space<vmem>>, vector<4x6x64xf32>
    %85 = arith.maximumf %83, %84 : vector<4x6x64xf32>
    %c0_108 = arith.constant 0 : index
    %c131 = arith.constant 131 : index
    %c0_109 = arith.constant 0 : index
    %86 = tpu.strided_load %arg3[%c0_108, %c131, %c0_109] {strides = array<i32: 1, 2, 1>} : memref<4x169x64xf32, #tpu.memory_space<vmem>>, vector<4x6x64xf32>
    %87 = arith.maximumf %85, %86 : vector<4x6x64xf32>
    %c0_110 = arith.constant 0 : index
    %c132 = arith.constant 132 : index
    %c0_111 = arith.constant 0 : index
    %88 = tpu.strided_load %arg3[%c0_110, %c132, %c0_111] {strides = array<i32: 1, 2, 1>} : memref<4x169x64xf32, #tpu.memory_space<vmem>>, vector<4x6x64xf32>
    %89 = arith.maximumf %87, %88 : vector<4x6x64xf32>
    %c0_112 = arith.constant 0 : index
    %c24 = arith.constant 24 : index
    %c0_113 = arith.constant 0 : index
    %90 = vector.load %arg4[%c0_112, %c24, %c0_113] : memref<4x36x64xf32, #tpu.memory_space<vmem>>, vector<4x6x64xf32>
    tpu.vector_store %arg4[%c0_112, %c24, %c0_113], %89 {strides = array<i32>} : memref<4x36x64xf32, #tpu.memory_space<vmem>>, vector<4x6x64xf32>,
    %c0_114 = arith.constant 0 : index
    %c130_115 = arith.constant 130 : index
    %c0_116 = arith.constant 0 : index
    %91 = tpu.strided_load %arg3[%c0_114, %c130_115, %c0_116] {strides = array<i32: 1, 2, 1>} : memref<4x169x64xf32, #tpu.memory_space<vmem>>, vector<4x6x64xf32>
    %c0_117 = arith.constant 0 : index
    %c131_118 = arith.constant 131 : index
    %c0_119 = arith.constant 0 : index
    %92 = tpu.strided_load %arg3[%c0_117, %c131_118, %c0_119] {strides = array<i32: 1, 2, 1>} : memref<4x169x64xf32, #tpu.memory_space<vmem>>, vector<4x6x64xf32>
    %93 = arith.maximumf %91, %92 : vector<4x6x64xf32>
    %c0_120 = arith.constant 0 : index
    %c132_121 = arith.constant 132 : index
    %c0_122 = arith.constant 0 : index
    %94 = tpu.strided_load %arg3[%c0_120, %c132_121, %c0_122] {strides = array<i32: 1, 2, 1>} : memref<4x169x64xf32, #tpu.memory_space<vmem>>, vector<4x6x64xf32>
    %95 = arith.maximumf %93, %94 : vector<4x6x64xf32>
    %c0_123 = arith.constant 0 : index
    %c143 = arith.constant 143 : index
    %c0_124 = arith.constant 0 : index
    %96 = tpu.strided_load %arg3[%c0_123, %c143, %c0_124] {strides = array<i32: 1, 2, 1>} : memref<4x169x64xf32, #tpu.memory_space<vmem>>, vector<4x6x64xf32>
    %97 = arith.maximumf %95, %96 : vector<4x6x64xf32>
    %c0_125 = arith.constant 0 : index
    %c144 = arith.constant 144 : index
    %c0_126 = arith.constant 0 : index
    %98 = tpu.strided_load %arg3[%c0_125, %c144, %c0_126] {strides = array<i32: 1, 2, 1>} : memref<4x169x64xf32, #tpu.memory_space<vmem>>, vector<4x6x64xf32>
    %99 = arith.maximumf %97, %98 : vector<4x6x64xf32>
    %c0_127 = arith.constant 0 : index
    %c145 = arith.constant 145 : index
    %c0_128 = arith.constant 0 : index
    %100 = tpu.strided_load %arg3[%c0_127, %c145, %c0_128] {strides = array<i32: 1, 2, 1>} : memref<4x169x64xf32, #tpu.memory_space<vmem>>, vector<4x6x64xf32>
    %101 = arith.maximumf %99, %100 : vector<4x6x64xf32>
    %c0_129 = arith.constant 0 : index
    %c156 = arith.constant 156 : index
    %c0_130 = arith.constant 0 : index
    %102 = tpu.strided_load %arg3[%c0_129, %c156, %c0_130] {strides = array<i32: 1, 2, 1>} : memref<4x169x64xf32, #tpu.memory_space<vmem>>, vector<4x6x64xf32>
    %103 = arith.maximumf %101, %102 : vector<4x6x64xf32>
    %c0_131 = arith.constant 0 : index
    %c157 = arith.constant 157 : index
    %c0_132 = arith.constant 0 : index
    %104 = tpu.strided_load %arg3[%c0_131, %c157, %c0_132] {strides = array<i32: 1, 2, 1>} : memref<4x169x64xf32, #tpu.memory_space<vmem>>, vector<4x6x64xf32>
    %105 = arith.maximumf %103, %104 : vector<4x6x64xf32>
    %c0_133 = arith.constant 0 : index
    %c158 = arith.constant 158 : index
    %c0_134 = arith.constant 0 : index
    %106 = tpu.strided_load %arg3[%c0_133, %c158, %c0_134] {strides = array<i32: 1, 2, 1>} : memref<4x169x64xf32, #tpu.memory_space<vmem>>, vector<4x6x64xf32>
    %107 = arith.maximumf %105, %106 : vector<4x6x64xf32>
    %c0_135 = arith.constant 0 : index
    %c30 = arith.constant 30 : index
    %c0_136 = arith.constant 0 : index
    %108 = vector.load %arg4[%c0_135, %c30, %c0_136] : memref<4x36x64xf32, #tpu.memory_space<vmem>>, vector<4x6x64xf32>
    tpu.vector_store %arg4[%c0_135, %c30, %c0_136], %107 {strides = array<i32>} : memref<4x36x64xf32, #tpu.memory_space<vmem>>, vector<4x6x64xf32>,
    %c0_i32_137 = arith.constant 0 : i32
    %c4_i32_138 = arith.constant 4 : i32
    %109 = arith.addi %c0_i32_137, %c4_i32_138 : i32
    %c1_i32_139 = arith.constant 1 : i32
    scf.for %arg5 = %c0_i32_137 to %109 step %c1_i32_139  : i32 {
      %c64_i32 = arith.constant 64 : i32
      %110 = arith.muli %arg5, %c64_i32 : i32
      %111 = tpu.assume_multiple %110, 64 : i32
      %112 = arith.index_cast %arg5 : i32 to index
      %c0_141 = arith.constant 0 : index
      %c0_142 = arith.constant 0 : index
      %113 = vector.load %arg4[%112, %c0_141, %c0_142] : memref<4x36x64xf32, #tpu.memory_space<vmem>>, vector<1x36x64xf32>
      %114 = vector.shape_cast %113 : vector<1x36x64xf32> to vector<36x64xf32>
      %115 = tpu.transpose %114, [1, 0] : vector<36x64xf32> -> vector<64x36xf32>
      %116 = arith.index_cast %111 : i32 to index
      %c0_143 = arith.constant 0 : index
      %117 = vector.load %arg2[%116, %c0_143] : memref<256x36xf32, #tpu.memory_space<vmem>>, vector<64x36xf32>
      tpu.vector_store %arg2[%116, %c0_143], %115 {strides = array<i32>} : memref<256x36xf32, #tpu.memory_space<vmem>>, vector<64x36xf32>,
    }
    %c4_i32_140 = arith.constant 4 : i32
    return
  }
  func.func @transform_0(%arg0: i32) -> (i32, i32) {
    %c0_i32 = arith.constant 0 : i32
    %c0_i32_0 = arith.constant 0 : i32
    %c0_i32_1 = arith.constant 0 : i32
    return %c0_i32, %c0_i32_0 : i32, i32
  }
  func.func @transform_1(%arg0: i32) -> (i32, i32) {
    %c0_i32 = arith.constant 0 : i32
    %c0_i32_0 = arith.constant 0 : i32
    %c0_i32_1 = arith.constant 0 : i32
    return %c0_i32, %c0_i32_0 : i32, i32
  }
}

</mosaic_0001>

<llo_original>
// kernel: maxpool2d_nchw.1
$region0: #{maxpool2d_nchw.1}
  #allocation0 [shape = 'u32[]', space=smem, size = 0x4, offset = 0x4, fixed_abs, tag = 'smem constant byte address 0x4 - core index']
  #allocation1 [shape = 'u32[144,128]{1,0:T(1,128)}', space=vmem, size = 0x12000, scoped, tag = 'internal scratch']
  #allocation2 [shape = 'f32[4,169,64]{2,1,0:T(8,128)}', space=vmem, size = 0x58000, scoped, tag = 'scratch operand']
  #allocation3 [shape = 'f32[4,36,64]{2,1,0:T(8,128)}', space=vmem, size = 0x14000, scoped, tag = 'scratch operand']
  %s0 = inlined_call_operand.vmem [shape: f32[256,169], index: 0, kind: input, shape index: {}]
  %s1 = inlined_call_operand.vmem [shape: f32[256,36], index: 1, kind: output, shape index: {}]
  %s2 = sld [smem:[#allocation0]]
  $region28: #{maxpool2d_nchw.1} parent=0
    _
  %s4 = ssub.s32 1, %s2
  %s5 = scalar_select 0, %s4, %s2
  // Predicated region
  $region2: #{maxpool2d_nchw.1} parent=0 // pred_check
    _
  $region3: #{maxpool2d_nchw.1} parent=0 // pred_check_branch
    %7 = sbr.rel (0) target = $region5
  $region4: #{maxpool2d_nchw.1} parent=0 // pred_region
    _
  $region5: #{maxpool2d_nchw.1} parent=0 // pred_fallthru
    _
  loop: start=0, step=1, limit=4
  $region6: #{maxpool2d_nchw.1} parent=0 // loop_pre_header
    _
  $region7: #{maxpool2d_nchw.1} parent=0 // loop_header
    %s9 = sphi 0, %s13
    %p10 = scmp.ge.s32.totalorder %s9, 4
  $region8: #{maxpool2d_nchw.1} parent=0 // loop_header_branch
    %12 = sbr.rel (%p10) target = $region12
  $region9: #{maxpool2d_nchw.1} parent=0 // loop_body
    %s14 = smul.u32 %s9, 64
    %s15 = sshra.s32 %s14, 3
    %s16 = sand.u32 %s14, 7
    %s17 = smul.u32 %s15, 2
    %s18 = smul.addr %s17, 8
    %s19 = scalar_lea.vmem %s0, %s18
    %v20 = vld [vmem:[%s19] sm:$0xff]
    %v21 = vld [vmem:[%s19 + $0x8] sm:$0xff]
    %v22 = vld [vmem:[%s19 + $0x10] sm:$0xff]
    %v23 = vld [vmem:[%s19 + $0x18] sm:$0xff]
    %v24 = vld [vmem:[%s19 + $0x20] sm:$0xff]
    %v25 = vld [vmem:[%s19 + $0x28] sm:$0xff]
    %v26 = vld [vmem:[%s19 + $0x30] sm:$0xff]
    %v27 = vld [vmem:[%s19 + $0x38] sm:$0xff]
    %v28 = vld [vmem:[%s19 + $0x40] sm:$0xff]
    %v29 = vld [vmem:[%s19 + $0x48] sm:$0xff]
    %v30 = vld [vmem:[%s19 + $0x50] sm:$0xff]
    %v31 = vld [vmem:[%s19 + $0x58] sm:$0xff]
    %v32 = vld [vmem:[%s19 + $0x60] sm:$0xff]
    %v33 = vld [vmem:[%s19 + $0x68] sm:$0xff]
    %v34 = vld [vmem:[%s19 + $0x70] sm:$0xff]
    %v35 = vld [vmem:[%s19 + $0x78] sm:$0xff]
    %36 = vxpose.xlu0.b32.start [1/16] %v20, 128
    %37 = vxpose.xlu0.b32.cont [2/16] %v22, 128
    %38 = vxpose.xlu0.b32.cont [3/16] %v24, 128
    %39 = vxpose.xlu0.b32.cont [4/16] %v26, 128
    %40 = vxpose.xlu0.b32.cont [5/16] %v28, 128
    %41 = vxpose.xlu0.b32.cont [6/16] %v30, 128
    %42 = vxpose.xlu0.b32.cont [7/16] %v32, 128
    %43 = vxpose.xlu0.b32.cont [8/16] %v34, 128
    %44 = vxpose.xlu0.b32.cont [9/16] 0.0, 128
    %45 = vxpose.xlu0.b32.cont [10/16] 0.0, 128
    %46 = vxpose.xlu0.b32.cont [11/16] 0.0, 128
    %47 = vxpose.xlu0.b32.cont [12/16] 0.0, 128
    %48 = vxpose.xlu0.b32.cont [13/16] 0.0, 128
    %49 = vxpose.xlu0.b32.cont [14/16] 0.0, 128
    %50 = vxpose.xlu0.b32.cont [15/16] 0.0, 128
    %51 = vxpose.xlu0.b32.end [16/16] 0.0, 128
    %v52 = vpop.trf.xlu0
    %v53 = vpop.trf.xlu0
    %v54 = vpop.trf.xlu0
    %v55 = vpop.trf.xlu0
    %v56 = vpop.trf.xlu0
    %v57 = vpop.trf.xlu0
    %v58 = vpop.trf.xlu0
    %v59 = vpop.trf.xlu0
    %v60 = vpop.trf.xlu0
    %v61 = vpop.trf.xlu0
    %v62 = vpop.trf.xlu0
    %v63 = vpop.trf.xlu0
    %v64 = vpop.trf.xlu0
    %v65 = vpop.trf.xlu0
    %v66 = vpop.trf.xlu0
    %v67 = vpop.trf.xlu0
    %68 = vxpose.xlu0.b32.start [1/16] %v21, 128
    %69 = vxpose.xlu0.b32.cont [2/16] %v23, 128
    %70 = vxpose.xlu0.b32.cont [3/16] %v25, 128
    %71 = vxpose.xlu0.b32.cont [4/16] %v27, 128
    %72 = vxpose.xlu0.b32.cont [5/16] %v29, 128
    %73 = vxpose.xlu0.b32.cont [6/16] %v31, 128
    %74 = vxpose.xlu0.b32.cont [7/16] %v33, 128
    %75 = vxpose.xlu0.b32.cont [8/16] %v35, 128
    %76 = vxpose.xlu0.b32.cont [9/16] 0.0, 128
    %77 = vxpose.xlu0.b32.cont [10/16] 0.0, 128
    %78 = vxpose.xlu0.b32.cont [11/16] 0.0, 128
    %79 = vxpose.xlu0.b32.cont [12/16] 0.0, 128
    %80 = vxpose.xlu0.b32.cont [13/16] 0.0, 128
    %81 = vxpose.xlu0.b32.cont [14/16] 0.0, 128
    %82 = vxpose.xlu0.b32.cont [15/16] 0.0, 128
    %83 = vxpose.xlu0.b32.end [16/16] 0.0, 128
    %v84 = vpop.trf.xlu0
    %v85 = vpop.trf.xlu0
    %v86 = vpop.trf.xlu0
    %v87 = vpop.trf.xlu0
    %v88 = vpop.trf.xlu0
    %v89 = vpop.trf.xlu0
    %v90 = vpop.trf.xlu0
    %v91 = vpop.trf.xlu0
    %v92 = vpop.trf.xlu0
    %v93 = vpop.trf.xlu0
    %v94 = vpop.trf.xlu0
    %v95 = vpop.trf.xlu0
    %v96 = vpop.trf.xlu0
    %v97 = vpop.trf.xlu0
    %v98 = vpop.trf.xlu0
    %v99 = vpop.trf.xlu0
    %s100 = smul.u32 %s9, 176
    %s101 = scalar_lea.vmem [#allocation2], %s100
    %vm102 = vcmask 523264
    %103 = vst.msk [vmem:[%s101] sm:$0xff] %vm102, %v52
    %104 = vst.msk [vmem:[%s101 + $0x8] sm:$0xff] %vm102, %v53
    %105 = vst.msk [vmem:[%s101 + $0x10] sm:$0xff] %vm102, %v54
    %106 = vst.msk [vmem:[%s101 + $0x18] sm:$0xff] %vm102, %v55
    %107 = vst.msk [vmem:[%s101 + $0x20] sm:$0xff] %vm102, %v56
    %108 = vst.msk [vmem:[%s101 + $0x28] sm:$0xff] %vm102, %v57
    %109 = vst.msk [vmem:[%s101 + $0x30] sm:$0xff] %vm102, %v58
    %110 = vst.msk [vmem:[%s101 + $0x38] sm:$0xff] %vm102, %v59
    %111 = vst.msk [vmem:[%s101 + $0x40] sm:$0xff] %vm102, %v60
    %112 = vst.msk [vmem:[%s101 + $0x48] sm:$0xff] %vm102, %v61
    %113 = vst.msk [vmem:[%s101 + $0x50] sm:$0xff] %vm102, %v62
    %114 = vst.msk [vmem:[%s101 + $0x58] sm:$0xff] %vm102, %v63
    %115 = vst.msk [vmem:[%s101 + $0x60] sm:$0xff] %vm102, %v64
    %116 = vst.msk [vmem:[%s101 + $0x68] sm:$0xff] %vm102, %v65
    %117 = vst.msk [vmem:[%s101 + $0x70] sm:$0xff] %vm102, %v66
    %118 = vst.msk [vmem:[%s101 + $0x78] sm:$0xff] %vm102, %v67
    %119 = vst.msk [vmem:[%s101 + $0x80] sm:$0xff] %vm102, %v84
    %120 = vst.msk [vmem:[%s101 + $0x88] sm:$0xff] %vm102, %v85
    %121 = vst.msk [vmem:[%s101 + $0x90] sm:$0xff] %vm102, %v86
    %122 = vst.msk [vmem:[%s101 + $0x98] sm:$0xff] %vm102, %v87
    %123 = vst.msk [vmem:[%s101 + $0xa0] sm:$0xff] %vm102, %v88
    %vm124 = vcmask 516096
    %125 = vst.msk [vmem:[%s101 + $0xa8] sm:$0x1] %vm124, %v89
  $region10: #{maxpool2d_nchw.1} parent=0 // loop_footer
    %s13 = sadd.s32 1, %s9
  $region11: #{maxpool2d_nchw.1} parent=0 // loop_footer_branch
    %8 = sbr.rel target = $region7
  $region12: #{maxpool2d_nchw.1} parent=0 // loop_exit
    _
  %v126 = vld [vmem:[#allocation2] ss:$2 sm:$0x3f]
  %s127 = scalar_lea.vmem [#allocation2], 176
  %v128 = vld [vmem:[%s127] ss:$2 sm:$0x3f]
  %s129 = scalar_lea.vmem [#allocation2], 352
  %v130 = vld [vmem:[%s129] ss:$2 sm:$0x3f]
  %s131 = scalar_lea.vmem [#allocation2], 528
  %v132 = vld [vmem:[%s131] ss:$2 sm:$0x3f]
  %s133 = scalar_lea.vmem [#allocation2], 1
  %v134 = vld [vmem:[%s133] ss:$2 sm:$0x3f]
  %s135 = scalar_lea.vmem [#allocation2], 177
  %v136 = vld [vmem:[%s135] ss:$2 sm:$0x3f]
  %s137 = scalar_lea.vmem [#allocation2], 353
  %v138 = vld [vmem:[%s137] ss:$2 sm:$0x3f]
  %s139 = scalar_lea.vmem [#allocation2], 529
  %v140 = vld [vmem:[%s139] ss:$2 sm:$0x3f]
  %v141 = vmax.f32 %v126, %v134
  %v142 = vmax.f32 %v128, %v136
  %v143 = vmax.f32 %v130, %v138
  %v144 = vmax.f32 %v132, %v140
  %s145 = scalar_lea.vmem [#allocation2], 2
  %v146 = vld [vmem:[%s145] ss:$2 sm:$0x3f]
  %s147 = scalar_lea.vmem [#allocation2], 178
  %v148 = vld [vmem:[%s147] ss:$2 sm:$0x3f]
  %s149 = scalar_lea.vmem [#allocation2], 354
  %v150 = vld [vmem:[%s149] ss:$2 sm:$0x3f]
  %s151 = scalar_lea.vmem [#allocation2], 530
  %v152 = vld [vmem:[%s151] ss:$2 sm:$0x3f]
  %v153 = vmax.f32 %v141, %v146
  %v154 = vmax.f32 %v142, %v148
  %v155 = vmax.f32 %v143, %v150
  %v156 = vmax.f32 %v144, %v152
  %s157 = scalar_lea.vmem [#allocation2], 13
  %v158 = vld [vmem:[%s157] ss:$2 sm:$0x3f]
  %s159 = scalar_lea.vmem [#allocation2], 189
  %v160 = vld [vmem:[%s159] ss:$2 sm:$0x3f]
  %s161 = scalar_lea.vmem [#allocation2], 365
  %v162 = vld [vmem:[%s161] ss:$2 sm:$0x3f]
  %s163 = scalar_lea.vmem [#allocation2], 541
  %v164 = vld [vmem:[%s163] ss:$2 sm:$0x3f]
  %v165 = vmax.f32 %v153, %v158
  %v166 = vmax.f32 %v154, %v160
  %v167 = vmax.f32 %v155, %v162
  %v168 = vmax.f32 %v156, %v164
  %s169 = scalar_lea.vmem [#allocation2], 14
  %v170 = vld [vmem:[%s169] ss:$2 sm:$0x3f]
  %s171 = scalar_lea.vmem [#allocation2], 190
  %v172 = vld [vmem:[%s171] ss:$2 sm:$0x3f]
  %s173 = scalar_lea.vmem [#allocation2], 366
  %v174 = vld [vmem:[%s173] ss:$2 sm:$0x3f]
  %s175 = scalar_lea.vmem [#allocation2], 542
  %v176 = vld [vmem:[%s175] ss:$2 sm:$0x3f]
  %v177 = vmax.f32 %v165, %v170
  %v178 = vmax.f32 %v166, %v172
  %v179 = vmax.f32 %v167, %v174
  %v180 = vmax.f32 %v168, %v176
  %s181 = scalar_lea.vmem [#allocation2], 15
  %v182 = vld [vmem:[%s181] ss:$2 sm:$0x3f]
  %s183 = scalar_lea.vmem [#allocation2], 191
  %v184 = vld [vmem:[%s183] ss:$2 sm:$0x3f]
  %s185 = scalar_lea.vmem [#allocation2], 367
  %v186 = vld [vmem:[%s185] ss:$2 sm:$0x3f]
  %s187 = scalar_lea.vmem [#allocation2], 543
  %v188 = vld [vmem:[%s187] ss:$2 sm:$0x3f]
  %v189 = vmax.f32 %v177, %v182
  %v190 = vmax.f32 %v178, %v184
  %v191 = vmax.f32 %v179, %v186
  %v192 = vmax.f32 %v180, %v188
  %s193 = scalar_lea.vmem [#allocation2], 26
  %v194 = vld [vmem:[%s193] ss:$2 sm:$0x3f]
  %s195 = scalar_lea.vmem [#allocation2], 202
  %v196 = vld [vmem:[%s195] ss:$2 sm:$0x3f]
  %s197 = scalar_lea.vmem [#allocation2], 378
  %v198 = vld [vmem:[%s197] ss:$2 sm:$0x3f]
  %s199 = scalar_lea.vmem [#allocation2], 554
  %v200 = vld [vmem:[%s199] ss:$2 sm:$0x3f]
  %v201 = vmax.f32 %v189, %v194
  %v202 = vmax.f32 %v190, %v196
  %v203 = vmax.f32 %v191, %v198
  %v204 = vmax.f32 %v192, %v200
  %s205 = scalar_lea.vmem [#allocation2], 27
  %v206 = vld [vmem:[%s205] ss:$2 sm:$0x3f]
  %s207 = scalar_lea.vmem [#allocation2], 203
  %v208 = vld [vmem:[%s207] ss:$2 sm:$0x3f]
  %s209 = scalar_lea.vmem [#allocation2], 379
  %v210 = vld [vmem:[%s209] ss:$2 sm:$0x3f]
  %s211 = scalar_lea.vmem [#allocation2], 555
  %v212 = vld [vmem:[%s211] ss:$2 sm:$0x3f]
  %v213 = vmax.f32 %v201, %v206
  %v214 = vmax.f32 %v202, %v208
  %v215 = vmax.f32 %v203, %v210
  %v216 = vmax.f32 %v204, %v212
  %s217 = scalar_lea.vmem [#allocation2], 28
  %v218 = vld [vmem:[%s217] ss:$2 sm:$0x3f]
  %s219 = scalar_lea.vmem [#allocation2], 204
  %v220 = vld [vmem:[%s219] ss:$2 sm:$0x3f]
  %s221 = scalar_lea.vmem [#allocation2], 380
  %v222 = vld [vmem:[%s221] ss:$2 sm:$0x3f]
  %s223 = scalar_lea.vmem [#allocation2], 556
  %v224 = vld [vmem:[%s223] ss:$2 sm:$0x3f]
  %v225 = vmax.f32 %v213, %v218
  %v226 = vmax.f32 %v214, %v220
  %v227 = vmax.f32 %v215, %v222
  %v228 = vmax.f32 %v216, %v224
  %vm229 = vcmask 521216
  %230 = vst.msk [vmem:[#allocation3] sm:$0x3f] %vm229, %v225
  %231 = vst.msk [vmem:[#allocation3 + $0x28] sm:$0x3f] %vm229, %v226
  %232 = vst.msk [vmem:[#allocation3 + $0x50] sm:$0x3f] %vm229, %v227
  %233 = vst.msk [vmem:[#allocation3 + $0x78] sm:$0x3f] %vm229, %v228
  %v234 = vld [vmem:[%s193] ss:$2 sm:$0x3f]
  %v235 = vld [vmem:[%s195] ss:$2 sm:$0x3f]
  %v236 = vld [vmem:[%s197] ss:$2 sm:$0x3f]
  %v237 = vld [vmem:[%s199] ss:$2 sm:$0x3f]
  %v238 = vld [vmem:[%s205] ss:$2 sm:$0x3f]
  %v239 = vld [vmem:[%s207] ss:$2 sm:$0x3f]
  %v240 = vld [vmem:[%s209] ss:$2 sm:$0x3f]
  %v241 = vld [vmem:[%s211] ss:$2 sm:$0x3f]
  %v242 = vmax.f32 %v234, %v238
  %v243 = vmax.f32 %v235, %v239
  %v244 = vmax.f32 %v236, %v240
  %v245 = vmax.f32 %v237, %v241
  %v246 = vld [vmem:[%s217] ss:$2 sm:$0x3f]
  %v247 = vld [vmem:[%s219] ss:$2 sm:$0x3f]
  %v248 = vld [vmem:[%s221] ss:$2 sm:$0x3f]
  %v249 = vld [vmem:[%s223] ss:$2 sm:$0x3f]
  %v250 = vmax.f32 %v242, %v246
  %v251 = vmax.f32 %v243, %v247
  %v252 = vmax.f32 %v244, %v248
  %v253 = vmax.f32 %v245, %v249
  %s254 = scalar_lea.vmem [#allocation2], 39
  %v255 = vld [vmem:[%s254] ss:$2 sm:$0x3f]
  %s256 = scalar_lea.vmem [#allocation2], 215
  %v257 = vld [vmem:[%s256] ss:$2 sm:$0x3f]
  %s258 = scalar_lea.vmem [#allocation2], 391
  %v259 = vld [vmem:[%s258] ss:$2 sm:$0x3f]
  %s260 = scalar_lea.vmem [#allocation2], 567
  %v261 = vld [vmem:[%s260] ss:$2 sm:$0x3f]
  %v262 = vmax.f32 %v250, %v255
  %v263 = vmax.f32 %v251, %v257
  %v264 = vmax.f32 %v252, %v259
  %v265 = vmax.f32 %v253, %v261
  %s266 = scalar_lea.vmem [#allocation2], 40
  %v267 = vld [vmem:[%s266] ss:$2 sm:$0x3f]
  %s268 = scalar_lea.vmem [#allocation2], 216
  %v269 = vld [vmem:[%s268] ss:$2 sm:$0x3f]
  %s270 = scalar_lea.vmem [#allocation2], 392
  %v271 = vld [vmem:[%s270] ss:$2 sm:$0x3f]
  %s272 = scalar_lea.vmem [#allocation2], 568
  %v273 = vld [vmem:[%s272] ss:$2 sm:$0x3f]
  %v274 = vmax.f32 %v262, %v267
  %v275 = vmax.f32 %v263, %v269
  %v276 = vmax.f32 %v264, %v271
  %v277 = vmax.f32 %v265, %v273
  %s278 = scalar_lea.vmem [#allocation2], 41
  %v279 = vld [vmem:[%s278] ss:$2 sm:$0x3f]
  %s280 = scalar_lea.vmem [#allocation2], 217
  %v281 = vld [vmem:[%s280] ss:$2 sm:$0x3f]
  %s282 = scalar_lea.vmem [#allocation2], 393
  %v283 = vld [vmem:[%s282] ss:$2 sm:$0x3f]
  %s284 = scalar_lea.vmem [#allocation2], 569
  %v285 = vld [vmem:[%s284] ss:$2 sm:$0x3f]
  %v286 = vmax.f32 %v274, %v279
  %v287 = vmax.f32 %v275, %v281
  %v288 = vmax.f32 %v276, %v283
  %v289 = vmax.f32 %v277, %v285
  %s290 = scalar_lea.vmem [#allocation2], 52
  %v291 = vld [vmem:[%s290] ss:$2 sm:$0x3f]
  %s292 = scalar_lea.vmem [#allocation2], 228
  %v293 = vld [vmem:[%s292] ss:$2 sm:$0x3f]
  %s294 = scalar_lea.vmem [#allocation2], 404
  %v295 = vld [vmem:[%s294] ss:$2 sm:$0x3f]
  %s296 = scalar_lea.vmem [#allocation2], 580
  %v297 = vld [vmem:[%s296] ss:$2 sm:$0x3f]
  %v298 = vmax.f32 %v286, %v291
  %v299 = vmax.f32 %v287, %v293
  %v300 = vmax.f32 %v288, %v295
  %v301 = vmax.f32 %v289, %v297
  %s302 = scalar_lea.vmem [#allocation2], 53
  %v303 = vld [vmem:[%s302] ss:$2 sm:$0x3f]
  %s304 = scalar_lea.vmem [#allocation2], 229
  %v305 = vld [vmem:[%s304] ss:$2 sm:$0x3f]
  %s306 = scalar_lea.vmem [#allocation2], 405
  %v307 = vld [vmem:[%s306] ss:$2 sm:$0x3f]
  %s308 = scalar_lea.vmem [#allocation2], 581
  %v309 = vld [vmem:[%s308] ss:$2 sm:$0x3f]
  %v310 = vmax.f32 %v298, %v303
  %v311 = vmax.f32 %v299, %v305
  %v312 = vmax.f32 %v300, %v307
  %v313 = vmax.f32 %v301, %v309
  %s314 = scalar_lea.vmem [#allocation2], 54
  %v315 = vld [vmem:[%s314] ss:$2 sm:$0x3f]
  %s316 = scalar_lea.vmem [#allocation2], 230
  %v317 = vld [vmem:[%s316] ss:$2 sm:$0x3f]
  %s318 = scalar_lea.vmem [#allocation2], 406
  %v319 = vld [vmem:[%s318] ss:$2 sm:$0x3f]
  %s320 = scalar_lea.vmem [#allocation2], 582
  %v321 = vld [vmem:[%s320] ss:$2 sm:$0x3f]
  %v322 = vmax.f32 %v310, %v315
  %v323 = vmax.f32 %v311, %v317
  %v324 = vmax.f32 %v312, %v319
  %v325 = vmax.f32 %v313, %v321
  %326 = vst.msk [vmem:[#allocation3 + $0x6] sm:$0x3f] %vm229, %v322
  %327 = vst.msk [vmem:[#allocation3 + $0x2e] sm:$0x3f] %vm229, %v323
  %328 = vst.msk [vmem:[#allocation3 + $0x56] sm:$0x3f] %vm229, %v324
  %329 = vst.msk [vmem:[#allocation3 + $0x7e] sm:$0x3f] %vm229, %v325
  %v330 = vld [vmem:[%s290] ss:$2 sm:$0x3f]
  %v331 = vld [vmem:[%s292] ss:$2 sm:$0x3f]
  %v332 = vld [vmem:[%s294] ss:$2 sm:$0x3f]
  %v333 = vld [vmem:[%s296] ss:$2 sm:$0x3f]
  %v334 = vld [vmem:[%s302] ss:$2 sm:$0x3f]
  %v335 = vld [vmem:[%s304] ss:$2 sm:$0x3f]
  %v336 = vld [vmem:[%s306] ss:$2 sm:$0x3f]
  %v337 = vld [vmem:[%s308] ss:$2 sm:$0x3f]
  %v338 = vmax.f32 %v330, %v334
  %v339 = vmax.f32 %v331, %v335
  %v340 = vmax.f32 %v332, %v336
  %v341 = vmax.f32 %v333, %v337
  %v342 = vld [vmem:[%s314] ss:$2 sm:$0x3f]
  %v343 = vld [vmem:[%s316] ss:$2 sm:$0x3f]
  %v344 = vld [vmem:[%s318] ss:$2 sm:$0x3f]
  %v345 = vld [vmem:[%s320] ss:$2 sm:$0x3f]
  %v346 = vmax.f32 %v338, %v342
  %v347 = vmax.f32 %v339, %v343
  %v348 = vmax.f32 %v340, %v344
  %v349 = vmax.f32 %v341, %v345
  %s350 = scalar_lea.vmem [#allocation2], 65
  %v351 = vld [vmem:[%s350] ss:$2 sm:$0x3f]
  %s352 = scalar_lea.vmem [#allocation2], 241
  %v353 = vld [vmem:[%s352] ss:$2 sm:$0x3f]
  %s354 = scalar_lea.vmem [#allocation2], 417
  %v355 = vld [vmem:[%s354] ss:$2 sm:$0x3f]
  %s356 = scalar_lea.vmem [#allocation2], 593
  %v357 = vld [vmem:[%s356] ss:$2 sm:$0x3f]
  %v358 = vmax.f32 %v346, %v351
  %v359 = vmax.f32 %v347, %v353
  %v360 = vmax.f32 %v348, %v355
  %v361 = vmax.f32 %v349, %v357
  %s362 = scalar_lea.vmem [#allocation2], 66
  %v363 = vld [vmem:[%s362] ss:$2 sm:$0x3f]
  %s364 = scalar_lea.vmem [#allocation2], 242
  %v365 = vld [vmem:[%s364] ss:$2 sm:$0x3f]
  %s366 = scalar_lea.vmem [#allocation2], 418
  %v367 = vld [vmem:[%s366] ss:$2 sm:$0x3f]
  %s368 = scalar_lea.vmem [#allocation2], 594
  %v369 = vld [vmem:[%s368] ss:$2 sm:$0x3f]
  %v370 = vmax.f32 %v358, %v363
  %v371 = vmax.f32 %v359, %v365
  %v372 = vmax.f32 %v360, %v367
  %v373 = vmax.f32 %v361, %v369
  %s374 = scalar_lea.vmem [#allocation2], 67
  %v375 = vld [vmem:[%s374] ss:$2 sm:$0x3f]
  %s376 = scalar_lea.vmem [#allocation2], 243
  %v377 = vld [vmem:[%s376] ss:$2 sm:$0x3f]
  %s378 = scalar_lea.vmem [#allocation2], 419
  %v379 = vld [vmem:[%s378] ss:$2 sm:$0x3f]
  %s380 = scalar_lea.vmem [#allocation2], 595
  %v381 = vld [vmem:[%s380] ss:$2 sm:$0x3f]
  %v382 = vmax.f32 %v370, %v375
  %v383 = vmax.f32 %v371, %v377
  %v384 = vmax.f32 %v372, %v379
  %v385 = vmax.f32 %v373, %v381
  %s386 = scalar_lea.vmem [#allocation2], 78
  %v387 = vld [vmem:[%s386] ss:$2 sm:$0x3f]
  %s388 = scalar_lea.vmem [#allocation2], 254
  %v389 = vld [vmem:[%s388] ss:$2 sm:$0x3f]
  %s390 = scalar_lea.vmem [#allocation2], 430
  %v391 = vld [vmem:[%s390] ss:$2 sm:$0x3f]
  %s392 = scalar_lea.vmem [#allocation2], 606
  %v393 = vld [vmem:[%s392] ss:$2 sm:$0x3f]
  %v394 = vmax.f32 %v382, %v387
  %v395 = vmax.f32 %v383, %v389
  %v396 = vmax.f32 %v384, %v391
  %v397 = vmax.f32 %v385, %v393
  %s398 = scalar_lea.vmem [#allocation2], 79
  %v399 = vld [vmem:[%s398] ss:$2 sm:$0x3f]
  %s400 = scalar_lea.vmem [#allocation2], 255
  %v401 = vld [vmem:[%s400] ss:$2 sm:$0x3f]
  %s402 = scalar_lea.vmem [#allocation2], 431
  %v403 = vld [vmem:[%s402] ss:$2 sm:$0x3f]
  %s404 = scalar_lea.vmem [#allocation2], 607
  %v405 = vld [vmem:[%s404] ss:$2 sm:$0x3f]
  %v406 = vmax.f32 %v394, %v399
  %v407 = vmax.f32 %v395, %v401
  %v408 = vmax.f32 %v396, %v403
  %v409 = vmax.f32 %v397, %v405
  %s410 = scalar_lea.vmem [#allocation2], 80
  %v411 = vld [vmem:[%s410] ss:$2 sm:$0x3f]
  %s412 = scalar_lea.vmem [#allocation2], 256
  %v413 = vld [vmem:[%s412] ss:$2 sm:$0x3f]
  %s414 = scalar_lea.vmem [#allocation2], 432
  %v415 = vld [vmem:[%s414] ss:$2 sm:$0x3f]
  %s416 = scalar_lea.vmem [#allocation2], 608
  %v417 = vld [vmem:[%s416] ss:$2 sm:$0x3f]
  %v418 = vmax.f32 %v406, %v411
  %v419 = vmax.f32 %v407, %v413
  %v420 = vmax.f32 %v408, %v415
  %v421 = vmax.f32 %v409, %v417
  %422 = vst.msk [vmem:[#allocation3 + $0xc] sm:$0x3f] %vm229, %v418
  %423 = vst.msk [vmem:[#allocation3 + $0x34] sm:$0x3f] %vm229, %v419
  %424 = vst.msk [vmem:[#allocation3 + $0x5c] sm:$0x3f] %vm229, %v420
  %425 = vst.msk [vmem:[#allocation3 + $0x84] sm:$0x3f] %vm229, %v421
  %v426 = vld [vmem:[%s386] ss:$2 sm:$0x3f]
  %v427 = vld [vmem:[%s388] ss:$2 sm:$0x3f]
  %v428 = vld [vmem:[%s390] ss:$2 sm:$0x3f]
  %v429 = vld [vmem:[%s392] ss:$2 sm:$0x3f]
  %v430 = vld [vmem:[%s398] ss:$2 sm:$0x3f]
  %v431 = vld [vmem:[%s400] ss:$2 sm:$0x3f]
  %v432 = vld [vmem:[%s402] ss:$2 sm:$0x3f]
  %v433 = vld [vmem:[%s404] ss:$2 sm:$0x3f]
  %v434 = vmax.f32 %v426, %v430
  %v435 = vmax.f32 %v427, %v431
  %v436 = vmax.f32 %v428, %v432
  %v437 = vmax.f32 %v429, %v433
  %v438 = vld [vmem:[%s410] ss:$2 sm:$0x3f]
  %v439 = vld [vmem:[%s412] ss:$2 sm:$0x3f]
  %v440 = vld [vmem:[%s414] ss:$2 sm:$0x3f]
  %v441 = vld [vmem:[%s416] ss:$2 sm:$0x3f]
  %v442 = vmax.f32 %v434, %v438
  %v443 = vmax.f32 %v435, %v439
  %v444 = vmax.f32 %v436, %v440
  %v445 = vmax.f32 %v437, %v441
  %s446 = scalar_lea.vmem [#allocation2], 91
  %v447 = vld [vmem:[%s446] ss:$2 sm:$0x3f]
  %s448 = scalar_lea.vmem [#allocation2], 267
  %v449 = vld [vmem:[%s448] ss:$2 sm:$0x3f]
  %s450 = scalar_lea.vmem [#allocation2], 443
  %v451 = vld [vmem:[%s450] ss:$2 sm:$0x3f]
  %s452 = scalar_lea.vmem [#allocation2], 619
  %v453 = vld [vmem:[%s452] ss:$2 sm:$0x3f]
  %v454 = vmax.f32 %v442, %v447
  %v455 = vmax.f32 %v443, %v449
  %v456 = vmax.f32 %v444, %v451
  %v457 = vmax.f32 %v445, %v453
  %s458 = scalar_lea.vmem [#allocation2], 92
  %v459 = vld [vmem:[%s458] ss:$2 sm:$0x3f]
  %s460 = scalar_lea.vmem [#allocation2], 268
  %v461 = vld [vmem:[%s460] ss:$2 sm:$0x3f]
  %s462 = scalar_lea.vmem [#allocation2], 444
  %v463 = vld [vmem:[%s462] ss:$2 sm:$0x3f]
  %s464 = scalar_lea.vmem [#allocation2], 620
  %v465 = vld [vmem:[%s464] ss:$2 sm:$0x3f]
  %v466 = vmax.f32 %v454, %v459
  %v467 = vmax.f32 %v455, %v461
  %v468 = vmax.f32 %v456, %v463
  %v469 = vmax.f32 %v457, %v465
  %s470 = scalar_lea.vmem [#allocation2], 93
  %v471 = vld [vmem:[%s470] ss:$2 sm:$0x3f]
  %s472 = scalar_lea.vmem [#allocation2], 269
  %v473 = vld [vmem:[%s472] ss:$2 sm:$0x3f]
  %s474 = scalar_lea.vmem [#allocation2], 445
  %v475 = vld [vmem:[%s474] ss:$2 sm:$0x3f]
  %s476 = scalar_lea.vmem [#allocation2], 621
  %v477 = vld [vmem:[%s476] ss:$2 sm:$0x3f]
  %v478 = vmax.f32 %v466, %v471
  %v479 = vmax.f32 %v467, %v473
  %v480 = vmax.f32 %v468, %v475
  %v481 = vmax.f32 %v469, %v477
  %s482 = scalar_lea.vmem [#allocation2], 104
  %v483 = vld [vmem:[%s482] ss:$2 sm:$0x3f]
  %s484 = scalar_lea.vmem [#allocation2], 280
  %v485 = vld [vmem:[%s484] ss:$2 sm:$0x3f]
  %s486 = scalar_lea.vmem [#allocation2], 456
  %v487 = vld [vmem:[%s486] ss:$2 sm:$0x3f]
  %s488 = scalar_lea.vmem [#allocation2], 632
  %v489 = vld [vmem:[%s488] ss:$2 sm:$0x3f]
  %v490 = vmax.f32 %v478, %v483
  %v491 = vmax.f32 %v479, %v485
  %v492 = vmax.f32 %v480, %v487
  %v493 = vmax.f32 %v481, %v489
  %s494 = scalar_lea.vmem [#allocation2], 105
  %v495 = vld [vmem:[%s494] ss:$2 sm:$0x3f]
  %s496 = scalar_lea.vmem [#allocation2], 281
  %v497 = vld [vmem:[%s496] ss:$2 sm:$0x3f]
  %s498 = scalar_lea.vmem [#allocation2], 457
  %v499 = vld [vmem:[%s498] ss:$2 sm:$0x3f]
  %s500 = scalar_lea.vmem [#allocation2], 633
  %v501 = vld [vmem:[%s500] ss:$2 sm:$0x3f]
  %v502 = vmax.f32 %v490, %v495
  %v503 = vmax.f32 %v491, %v497
  %v504 = vmax.f32 %v492, %v499
  %v505 = vmax.f32 %v493, %v501
  %s506 = scalar_lea.vmem [#allocation2], 106
  %v507 = vld [vmem:[%s506] ss:$2 sm:$0x3f]
  %s508 = scalar_lea.vmem [#allocation2], 282
  %v509 = vld [vmem:[%s508] ss:$2 sm:$0x3f]
  %s510 = scalar_lea.vmem [#allocation2], 458
  %v511 = vld [vmem:[%s510] ss:$2 sm:$0x3f]
  %s512 = scalar_lea.vmem [#allocation2], 634
  %v513 = vld [vmem:[%s512] ss:$2 sm:$0x3f]
  %v514 = vmax.f32 %v502, %v507
  %v515 = vmax.f32 %v503, %v509
  %v516 = vmax.f32 %v504, %v511
  %v517 = vmax.f32 %v505, %v513
  %518 = vst.msk [vmem:[#allocation3 + $0x12] sm:$0x3f] %vm229, %v514
  %519 = vst.msk [vmem:[#allocation3 + $0x3a] sm:$0x3f] %vm229, %v515
  %520 = vst.msk [vmem:[#allocation3 + $0x62] sm:$0x3f] %vm229, %v516
  %521 = vst.msk [vmem:[#allocation3 + $0x8a] sm:$0x3f] %vm229, %v517
  %v522 = vld [vmem:[%s482] ss:$2 sm:$0x3f]
  %v523 = vld [vmem:[%s484] ss:$2 sm:$0x3f]
  %v524 = vld [vmem:[%s486] ss:$2 sm:$0x3f]
  %v525 = vld [vmem:[%s488] ss:$2 sm:$0x3f]
  %v526 = vld [vmem:[%s494] ss:$2 sm:$0x3f]
  %v527 = vld [vmem:[%s496] ss:$2 sm:$0x3f]
  %v528 = vld [vmem:[%s498] ss:$2 sm:$0x3f]
  %v529 = vld [vmem:[%s500] ss:$2 sm:$0x3f]
  %v530 = vmax.f32 %v522, %v526
  %v531 = vmax.f32 %v523, %v527
  %v532 = vmax.f32 %v524, %v528
  %v533 = vmax.f32 %v525, %v529
  %v534 = vld [vmem:[%s506] ss:$2 sm:$0x3f]
  %v535 = vld [vmem:[%s508] ss:$2 sm:$0x3f]
  %v536 = vld [vmem:[%s510] ss:$2 sm:$0x3f]
  %v537 = vld [vmem:[%s512] ss:$2 sm:$0x3f]
  %v538 = vmax.f32 %v530, %v534
  %v539 = vmax.f32 %v531, %v535
  %v540 = vmax.f32 %v532, %v536
  %v541 = vmax.f32 %v533, %v537
  %s542 = scalar_lea.vmem [#allocation2], 117
  %v543 = vld [vmem:[%s542] ss:$2 sm:$0x3f]
  %s544 = scalar_lea.vmem [#allocation2], 293
  %v545 = vld [vmem:[%s544] ss:$2 sm:$0x3f]
  %s546 = scalar_lea.vmem [#allocation2], 469
  %v547 = vld [vmem:[%s546] ss:$2 sm:$0x3f]
  %s548 = scalar_lea.vmem [#allocation2], 645
  %v549 = vld [vmem:[%s548] ss:$2 sm:$0x3f]
  %v550 = vmax.f32 %v538, %v543
  %v551 = vmax.f32 %v539, %v545
  %v552 = vmax.f32 %v540, %v547
  %v553 = vmax.f32 %v541, %v549
  %s554 = scalar_lea.vmem [#allocation2], 118
  %v555 = vld [vmem:[%s554] ss:$2 sm:$0x3f]
  %s556 = scalar_lea.vmem [#allocation2], 294
  %v557 = vld [vmem:[%s556] ss:$2 sm:$0x3f]
  %s558 = scalar_lea.vmem [#allocation2], 470
  %v559 = vld [vmem:[%s558] ss:$2 sm:$0x3f]
  %s560 = scalar_lea.vmem [#allocation2], 646
  %v561 = vld [vmem:[%s560] ss:$2 sm:$0x3f]
  %v562 = vmax.f32 %v550, %v555
  %v563 = vmax.f32 %v551, %v557
  %v564 = vmax.f32 %v552, %v559
  %v565 = vmax.f32 %v553, %v561
  %s566 = scalar_lea.vmem [#allocation2], 119
  %v567 = vld [vmem:[%s566] ss:$2 sm:$0x3f]
  %s568 = scalar_lea.vmem [#allocation2], 295
  %v569 = vld [vmem:[%s568] ss:$2 sm:$0x3f]
  %s570 = scalar_lea.vmem [#allocation2], 471
  %v571 = vld [vmem:[%s570] ss:$2 sm:$0x3f]
  %s572 = scalar_lea.vmem [#allocation2], 647
  %v573 = vld [vmem:[%s572] ss:$2 sm:$0x3f]
  %v574 = vmax.f32 %v562, %v567
  %v575 = vmax.f32 %v563, %v569
  %v576 = vmax.f32 %v564, %v571
  %v577 = vmax.f32 %v565, %v573
  %s578 = scalar_lea.vmem [#allocation2], 130
  %v579 = vld [vmem:[%s578] ss:$2 sm:$0x3f]
  %s580 = scalar_lea.vmem [#allocation2], 306
  %v581 = vld [vmem:[%s580] ss:$2 sm:$0x3f]
  %s582 = scalar_lea.vmem [#allocation2], 482
  %v583 = vld [vmem:[%s582] ss:$2 sm:$0x3f]
  %s584 = scalar_lea.vmem [#allocation2], 658
  %v585 = vld [vmem:[%s584] ss:$2 sm:$0x3f]
  %v586 = vmax.f32 %v574, %v579
  %v587 = vmax.f32 %v575, %v581
  %v588 = vmax.f32 %v576, %v583
  %v589 = vmax.f32 %v577, %v585
  %s590 = scalar_lea.vmem [#allocation2], 131
  %v591 = vld [vmem:[%s590] ss:$2 sm:$0x3f]
  %s592 = scalar_lea.vmem [#allocation2], 307
  %v593 = vld [vmem:[%s592] ss:$2 sm:$0x3f]
  %s594 = scalar_lea.vmem [#allocation2], 483
  %v595 = vld [vmem:[%s594] ss:$2 sm:$0x3f]
  %s596 = scalar_lea.vmem [#allocation2], 659
  %v597 = vld [vmem:[%s596] ss:$2 sm:$0x3f]
  %v598 = vmax.f32 %v586, %v591
  %v599 = vmax.f32 %v587, %v593
  %v600 = vmax.f32 %v588, %v595
  %v601 = vmax.f32 %v589, %v597
  %s602 = scalar_lea.vmem [#allocation2], 132
  %v603 = vld [vmem:[%s602] ss:$2 sm:$0x3f]
  %s604 = scalar_lea.vmem [#allocation2], 308
  %v605 = vld [vmem:[%s604] ss:$2 sm:$0x3f]
  %s606 = scalar_lea.vmem [#allocation2], 484
  %v607 = vld [vmem:[%s606] ss:$2 sm:$0x3f]
  %s608 = scalar_lea.vmem [#allocation2], 660
  %v609 = vld [vmem:[%s608] ss:$2 sm:$0x3f]
  %v610 = vmax.f32 %v598, %v603
  %v611 = vmax.f32 %v599, %v605
  %v612 = vmax.f32 %v600, %v607
  %v613 = vmax.f32 %v601, %v609
  %614 = vst.msk [vmem:[#allocation3 + $0x18] sm:$0x3f] %vm229, %v610
  %615 = vst.msk [vmem:[#allocation3 + $0x40] sm:$0x3f] %vm229, %v611
  %616 = vst.msk [vmem:[#allocation3 + $0x68] sm:$0x3f] %vm229, %v612
  %617 = vst.msk [vmem:[#allocation3 + $0x90] sm:$0x3f] %vm229, %v613
  %v618 = vld [vmem:[%s578] ss:$2 sm:$0x3f]
  %v619 = vld [vmem:[%s580] ss:$2 sm:$0x3f]
  %v620 = vld [vmem:[%s582] ss:$2 sm:$0x3f]
  %v621 = vld [vmem:[%s584] ss:$2 sm:$0x3f]
  %v622 = vld [vmem:[%s590] ss:$2 sm:$0x3f]
  %v623 = vld [vmem:[%s592] ss:$2 sm:$0x3f]
  %v624 = vld [vmem:[%s594] ss:$2 sm:$0x3f]
  %v625 = vld [vmem:[%s596] ss:$2 sm:$0x3f]
  %v626 = vmax.f32 %v618, %v622
  %v627 = vmax.f32 %v619, %v623
  %v628 = vmax.f32 %v620, %v624
  %v629 = vmax.f32 %v621, %v625
  %v630 = vld [vmem:[%s602] ss:$2 sm:$0x3f]
  %v631 = vld [vmem:[%s604] ss:$2 sm:$0x3f]
  %v632 = vld [vmem:[%s606] ss:$2 sm:$0x3f]
  %v633 = vld [vmem:[%s608] ss:$2 sm:$0x3f]
  %v634 = vmax.f32 %v626, %v630
  %v635 = vmax.f32 %v627, %v631
  %v636 = vmax.f32 %v628, %v632
  %v637 = vmax.f32 %v629, %v633
  %s638 = scalar_lea.vmem [#allocation2], 143
  %v639 = vld [vmem:[%s638] ss:$2 sm:$0x3f]
  %s640 = scalar_lea.vmem [#allocation2], 319
  %v641 = vld [vmem:[%s640] ss:$2 sm:$0x3f]
  %s642 = scalar_lea.vmem [#allocation2], 495
  %v643 = vld [vmem:[%s642] ss:$2 sm:$0x3f]
  %s644 = scalar_lea.vmem [#allocation2], 671
  %v645 = vld [vmem:[%s644] ss:$2 sm:$0x3f]
  %v646 = vmax.f32 %v634, %v639
  %v647 = vmax.f32 %v635, %v641
  %v648 = vmax.f32 %v636, %v643
  %v649 = vmax.f32 %v637, %v645
  %s650 = scalar_lea.vmem [#allocation2], 144
  %v651 = vld [vmem:[%s650] ss:$2 sm:$0x3f]
  %s652 = scalar_lea.vmem [#allocation2], 320
  %v653 = vld [vmem:[%s652] ss:$2 sm:$0x3f]
  %s654 = scalar_lea.vmem [#allocation2], 496
  %v655 = vld [vmem:[%s654] ss:$2 sm:$0x3f]
  %s656 = scalar_lea.vmem [#allocation2], 672
  %v657 = vld [vmem:[%s656] ss:$2 sm:$0x3f]
  %v658 = vmax.f32 %v646, %v651
  %v659 = vmax.f32 %v647, %v653
  %v660 = vmax.f32 %v648, %v655
  %v661 = vmax.f32 %v649, %v657
  %s662 = scalar_lea.vmem [#allocation2], 145
  %v663 = vld [vmem:[%s662] ss:$2 sm:$0x3f]
  %s664 = scalar_lea.vmem [#allocation2], 321
  %v665 = vld [vmem:[%s664] ss:$2 sm:$0x3f]
  %s666 = scalar_lea.vmem [#allocation2], 497
  %v667 = vld [vmem:[%s666] ss:$2 sm:$0x3f]
  %s668 = scalar_lea.vmem [#allocation2], 673
  %v669 = vld [vmem:[%s668] ss:$2 sm:$0x3f]
  %v670 = vmax.f32 %v658, %v663
  %v671 = vmax.f32 %v659, %v665
  %v672 = vmax.f32 %v660, %v667
  %v673 = vmax.f32 %v661, %v669
  %s674 = scalar_lea.vmem [#allocation2], 156
  %v675 = vld [vmem:[%s674] ss:$2 sm:$0x3f]
  %s676 = scalar_lea.vmem [#allocation2], 332
  %v677 = vld [vmem:[%s676] ss:$2 sm:$0x3f]
  %s678 = scalar_lea.vmem [#allocation2], 508
  %v679 = vld [vmem:[%s678] ss:$2 sm:$0x3f]
  %s680 = scalar_lea.vmem [#allocation2], 684
  %v681 = vld [vmem:[%s680] ss:$2 sm:$0x3f]
  %v682 = vmax.f32 %v670, %v675
  %v683 = vmax.f32 %v671, %v677
  %v684 = vmax.f32 %v672, %v679
  %v685 = vmax.f32 %v673, %v681
  %s686 = scalar_lea.vmem [#allocation2], 157
  %v687 = vld [vmem:[%s686] ss:$2 sm:$0x3f]
  %s688 = scalar_lea.vmem [#allocation2], 333
  %v689 = vld [vmem:[%s688] ss:$2 sm:$0x3f]
  %s690 = scalar_lea.vmem [#allocation2], 509
  %v691 = vld [vmem:[%s690] ss:$2 sm:$0x3f]
  %s692 = scalar_lea.vmem [#allocation2], 685
  %v693 = vld [vmem:[%s692] ss:$2 sm:$0x3f]
  %v694 = vmax.f32 %v682, %v687
  %v695 = vmax.f32 %v683, %v689
  %v696 = vmax.f32 %v684, %v691
  %v697 = vmax.f32 %v685, %v693
  %s698 = scalar_lea.vmem [#allocation2], 158
  %v699 = vld [vmem:[%s698] ss:$2 sm:$0x3f]
  %s700 = scalar_lea.vmem [#allocation2], 334
  %v701 = vld [vmem:[%s700] ss:$2 sm:$0x3f]
  %s702 = scalar_lea.vmem [#allocation2], 510
  %v703 = vld [vmem:[%s702] ss:$2 sm:$0x3f]
  %s704 = scalar_lea.vmem [#allocation2], 686
  %v705 = vld [vmem:[%s704] ss:$2 sm:$0x3f]
  %v706 = vmax.f32 %v694, %v699
  %v707 = vmax.f32 %v695, %v701
  %v708 = vmax.f32 %v696, %v703
  %v709 = vmax.f32 %v697, %v705
  %710 = vst.msk [vmem:[#allocation3 + $0x1e] sm:$0x3f] %vm229, %v706
  %711 = vst.msk [vmem:[#allocation3 + $0x46] sm:$0x3f] %vm229, %v707
  %712 = vst.msk [vmem:[#allocation3 + $0x6e] sm:$0x3f] %vm229, %v708
  %713 = vst.msk [vmem:[#allocation3 + $0x96] sm:$0x3f] %vm229, %v709
  loop: start=0, step=1, limit=4
  $region13: #{maxpool2d_nchw.1} parent=0 // loop_pre_header
    _
  $region14: #{maxpool2d_nchw.1} parent=0 // loop_header
    %s715 = sphi 0, %s719
    %p716 = scmp.ge.s32.totalorder %s715, 4
  $region15: #{maxpool2d_nchw.1} parent=0 // loop_header_branch
    %718 = sbr.rel (%p716) target = $region19
  $region16: #{maxpool2d_nchw.1} parent=0 // loop_body
    %s720 = smul.u32 %s715, 64
    %s721 = smul.u32 %s715, 40
    %s722 = scalar_lea.vmem [#allocation3], %s721
    %v723 = vld [vmem:[%s722] sm:$0xff]
    %v724 = vld [vmem:[%s722 + $0x8] sm:$0xff]
    %v725 = vld [vmem:[%s722 + $0x10] sm:$0xff]
    %v726 = vld [vmem:[%s722 + $0x18] sm:$0xff]
    %v727 = vld [vmem:[%s722 + $0x20] sm:$0xf]
    %728 = vxpose.xlu0.b32.start [1/16] %v723, 128
    %729 = vxpose.xlu0.b32.cont [2/16] %v724, 128
    %730 = vxpose.xlu0.b32.cont [3/16] %v725, 128
    %731 = vxpose.xlu0.b32.cont [4/16] %v726, 128
    %732 = vxpose.xlu0.b32.cont [5/16] %v727, 128
    %733 = vxpose.xlu0.b32.cont [6/16] 0.0, 128
    %734 = vxpose.xlu0.b32.cont [7/16] 0.0, 128
    %735 = vxpose.xlu0.b32.cont [8/16] 0.0, 128
    %736 = vxpose.xlu0.b32.cont [9/16] 0.0, 128
    %737 = vxpose.xlu0.b32.cont [10/16] 0.0, 128
    %738 = vxpose.xlu0.b32.cont [11/16] 0.0, 128
    %739 = vxpose.xlu0.b32.cont [12/16] 0.0, 128
    %740 = vxpose.xlu0.b32.cont [13/16] 0.0, 128
    %741 = vxpose.xlu0.b32.cont [14/16] 0.0, 128
    %742 = vxpose.xlu0.b32.cont [15/16] 0.0, 128
    %743 = vxpose.xlu0.b32.end [16/16] 0.0, 128
    %v744 = vpop.trf.xlu0
    %v745 = vpop.trf.xlu0
    %v746 = vpop.trf.xlu0
    %v747 = vpop.trf.xlu0
    %v748 = vpop.trf.xlu0
    %v749 = vpop.trf.xlu0
    %v750 = vpop.trf.xlu0
    %v751 = vpop.trf.xlu0
    %v752 = vpop.trf.xlu0
    %v753 = vpop.trf.xlu0
    %v754 = vpop.trf.xlu0
    %v755 = vpop.trf.xlu0
    %v756 = vpop.trf.xlu0
    %v757 = vpop.trf.xlu0
    %v758 = vpop.trf.xlu0
    %v759 = vpop.trf.xlu0
    %s760 = scalar_lea.vmem %s1, %s720
    %vm761 = vcmask 293888
    %762 = vst.msk [vmem:[%s760] sm:$0xff] %vm761, %v744
    %763 = vst.msk [vmem:[%s760 + $0x8] sm:$0xff] %vm761, %v745
    %764 = vst.msk [vmem:[%s760 + $0x10] sm:$0xff] %vm761, %v746
    %765 = vst.msk [vmem:[%s760 + $0x18] sm:$0xff] %vm761, %v747
    %766 = vst.msk [vmem:[%s760 + $0x20] sm:$0xff] %vm761, %v748
    %767 = vst.msk [vmem:[%s760 + $0x28] sm:$0xff] %vm761, %v749
    %768 = vst.msk [vmem:[%s760 + $0x30] sm:$0xff] %vm761, %v750
    %769 = vst.msk [vmem:[%s760 + $0x38] sm:$0xff] %vm761, %v751
  $region17: #{maxpool2d_nchw.1} parent=0 // loop_footer
    %s719 = sadd.s32 1, %s715
  $region18: #{maxpool2d_nchw.1} parent=0 // loop_footer_branch
    %714 = sbr.rel target = $region14
  $region19: #{maxpool2d_nchw.1} parent=0 // loop_exit
    _
  // Predicated region
  $region20: #{maxpool2d_nchw.1} parent=0 // pred_check
    _
  $region21: #{maxpool2d_nchw.1} parent=0 // pred_check_branch
    %771 = sbr.rel (0) target = $region23
  $region22: #{maxpool2d_nchw.1} parent=0 // pred_region
    _
  $region23: #{maxpool2d_nchw.1} parent=0 // pred_fallthru
    _
  // Predicated region
  $region24: #{maxpool2d_nchw.1} parent=0 // pred_check
    _
  $region25: #{maxpool2d_nchw.1} parent=0 // pred_check_branch
    %773 = sbr.rel (0) target = $region27
  $region26: #{maxpool2d_nchw.1} parent=0 // pred_region
    _
  $region27: #{maxpool2d_nchw.1} parent=0 // pred_fallthru
    _

</llo_original>
